<compile_context>
chip_gen: v6e
topology: v6e:2x2x1
jax: 0.10.0
libtpu: 0.0.40
codegen_flags: <defaults>
</compile_context>

<pallas_src>
import functools

import jax
import jax.numpy as jnp
from jax.experimental import pallas as pl
from jax.experimental.pallas import tpu as pltpu


def _round_up(x, m):
    return ((x + m - 1) // m) * m


def _make_wavefront_kernel(num_layers, B_p, T, H_p):
    """Kernel closed over static sizes.  Ref layout:
       refs[0] : x_flat    (T*B_p, E_p)        bf16  (time-major, padded embedding rows)
       refs[1] : w_in      (E_p, H_p)          bf16  (layer-0 W_ih^T, zero-padded)
       refs[2] : bias0     (1, H_p)            f32   (b_ih0 + b_hh0 folded)
       refs[3] : w_big     (L*H_p, L*H_p)      bf16  (fused block-bidiagonal recurrence weight)
       refs[4] : bias_rest (1, (L-1)*H_p)      f32   (folded biases, layers 1..L-1) [iff L > 1]
       refs[-3]: fc_w      (H_p, V_p)          bf16
       refs[-2]: fc_b      (1, V_p)            f32
       refs[-1]: out       (B_p, V_p)          f32
    """
    L = num_layers
    W = L * H_p
    n_steps = T + L - 1

    def kernel(*refs):
        x_ref, w_in_ref, bias0_ref, w_big_ref = refs[0], refs[1], refs[2], refs[3]
        idx = 4
        if L > 1:
            bias_rest_ref = refs[idx]
            idx += 1
        fc_w_ref, fc_b_ref, out_ref = refs[idx], refs[idx + 1], refs[idx + 2]

        # ---------- off-serial-path prep (free filler under the latency-bound recurrence) ------
        # Hoisted layer-0 input projection for ALL timesteps: one bulk MXU pass, bias added once.
        pre_x0 = jnp.dot(x_ref[...], w_in_ref[...],
                         preferred_element_type=jnp.float32) + bias0_ref[...]

        # Additive term for every wavefront step s, all layer blocks at once:
        #   block 0       , rows [s*B_p:(s+1)*B_p] : pre_x0[t = s]   if s <  T  else 0
        #   block l (>= 1), rows [s*B_p:(s+1)*B_p] : bias_l          if s >= l  else 0
        # Zero additive term for not-yet-started layers keeps their state exactly 0
        # (tanh(0 + 0 @ W) == 0), so no per-step select lands on the serial chain.
        if L > 1:
            cols = [jnp.concatenate(
                [pre_x0, jnp.zeros(((L - 1) * B_p, H_p), jnp.float32)], axis=0)]
            bias_rest = bias_rest_ref[...]
            for l in range(1, L):
                b_l = bias_rest[:, (l - 1) * H_p:l * H_p]          # (1, H_p)
                cols.append(jnp.concatenate(
                    [jnp.zeros((l * B_p, H_p), jnp.float32),
                     jnp.broadcast_to(b_l, ((n_steps - l) * B_p, H_p))], axis=0))
            add_all = jnp.concatenate(cols, axis=-1)               # (n_steps*B_p, L*H_p) f32
        else:
            add_all = pre_x0

        w_big = w_big_ref[...]                                     # (L*H_p, L*H_p) bf16

        # ---------- serial wavefront recurrence: T + L - 1 steps instead of L*T ----------------
        h_cat = jnp.zeros((B_p, W), jnp.float32)                   # [h0 | h1 | ... | h_{L-1}]
        for s in range(n_steps):                                   # static, unrolled
            add = add_all[s * B_p:(s + 1) * B_p, :]                # 8-row tile-aligned slice
            h_cat = jnp.tanh(add + jnp.dot(h_cat.astype(jnp.bfloat16), w_big,
                                           preferred_element_type=jnp.float32))
        # TODO(synk): RHS residency (matmul_push_rhs) / v7x MRB accumulation — see header.

        # Last layer's hidden at the last timestep lives in the last lane block.
        h_last = h_cat[:, (L - 1) * H_p:]
        out_ref[...] = (jnp.dot(h_last.astype(jnp.bfloat16), fc_w_ref[...],
                                preferred_element_type=jnp.float32) + fc_b_ref[...])

    return kernel


def init_params(key, vocab_size, embed_size, hidden_size, num_layers):
    """Deterministic synthetic parameters matching nn.Embedding / nn.RNN / nn.Linear shapes."""
    keys = jax.random.split(key, 2 + 4 * num_layers + 2)
    ki = iter(keys)
    params = {}
    params["embedding"] = jax.random.normal(next(ki), (vocab_size, embed_size), jnp.float32)

    bound = 1.0 / jnp.sqrt(hidden_size)
    rnn = []
    for layer in range(num_layers):
        in_dim = embed_size if layer == 0 else hidden_size
        w_ih = jax.random.uniform(next(ki), (hidden_size, in_dim), jnp.float32, -bound, bound)
        w_hh = jax.random.uniform(next(ki), (hidden_size, hidden_size), jnp.float32, -bound, bound)
        b_ih = jax.random.uniform(next(ki), (hidden_size,), jnp.float32, -bound, bound)
        b_hh = jax.random.uniform(next(ki), (hidden_size,), jnp.float32, -bound, bound)
        rnn.append((w_ih, w_hh, b_ih, b_hh))
    params["rnn"] = rnn

    fb = 1.0 / jnp.sqrt(hidden_size)
    params["fc_w"] = jax.random.uniform(next(ki), (vocab_size, hidden_size), jnp.float32, -fb, fb)
    params["fc_b"] = jax.random.uniform(next(ki), (vocab_size,), jnp.float32, -fb, fb)
    return params


def prepare_params(params):
    """ONE-TIME transpose / pad / cast of weights into kernel-ready layout.

    Kept out of the per-call forward path: re-running these pads / transposes / casts every call
    is pure XLA + HBM overhead that rivals the tiny kernel's runtime at inference steady state.
    """
    emb = params["embedding"]
    vocab_size, embed_size = emb.shape
    hidden_size = params["rnn"][0][1].shape[0]
    num_layers = len(params["rnn"])

    E_p = _round_up(embed_size, 128)
    H_p = _round_up(hidden_size, 128)
    V_p = _round_up(vocab_size, 128)

    prepared = {}
    # Embedding table pre-padded to 128 lanes, pre-cast to bf16 (gather reads half the bytes).
    prepared["embedding"] = jnp.pad(emb, ((0, 0), (0, E_p - embed_size))).astype(jnp.bfloat16)

    # Layer-0 input projection weight and folded bias.
    w_ih0, _, b_ih0, b_hh0 = params["rnn"][0]
    prepared["w_in"] = jnp.pad(
        w_ih0.T, ((0, E_p - embed_size), (0, H_p - hidden_size))).astype(jnp.bfloat16)
    prepared["bias0"] = jnp.pad(
        (b_ih0 + b_hh0).reshape(1, hidden_size),
        ((0, 0), (0, H_p - hidden_size))).astype(jnp.float32)

    # Fused wavefront recurrence weight: block (l, l) = Whh_l^T, block (l-1, l) = Wih_l^T,
    # every other block (including all padding) exactly zero so padded lanes stay 0.
    Wbig = num_layers * H_p
    w_big = jnp.zeros((Wbig, Wbig), jnp.float32)
    for l in range(num_layers):
        w_ih, w_hh, _, _ = params["rnn"][l]
        w_hh_t = jnp.pad(w_hh.T, ((0, H_p - hidden_size), (0, H_p - hidden_size)))
        w_big = w_big.at[l * H_p:(l + 1) * H_p, l * H_p:(l + 1) * H_p].set(w_hh_t)
        if l >= 1:
            w_ih_t = jnp.pad(w_ih.T, ((0, H_p - hidden_size), (0, H_p - hidden_size)))
            w_big = w_big.at[(l - 1) * H_p:l * H_p, l * H_p:(l + 1) * H_p].set(w_ih_t)
    prepared["w_big"] = w_big.astype(jnp.bfloat16)

    if num_layers > 1:
        rest = []
        for l in range(1, num_layers):
            _, _, b_ih, b_hh = params["rnn"][l]
            rest.append(jnp.pad((b_ih + b_hh).reshape(1, hidden_size),
                                ((0, 0), (0, H_p - hidden_size))))
        prepared["bias_rest"] = jnp.concatenate(rest, axis=-1).astype(jnp.float32)

    prepared["fc_w"] = jnp.pad(
        params["fc_w"].T,
        ((0, H_p - hidden_size), (0, V_p - vocab_size))).astype(jnp.bfloat16)
    prepared["fc_b"] = jnp.pad(
        params["fc_b"].reshape(1, vocab_size),
        ((0, 0), (0, V_p - vocab_size))).astype(jnp.float32)

    dims = dict(vocab_size=vocab_size, embed_size=embed_size, hidden_size=hidden_size,
                num_layers=num_layers, E_p=E_p, H_p=H_p, V_p=V_p)
    return prepared, dims


@functools.partial(jax.jit, static_argnames=("num_layers", "vocab_size"))
def rnn_model_forward(tokens, prepared, *, num_layers, vocab_size):
    """Forward pass matching RNNModel.forward semantics (logits for the last timestep)."""
    B, T = tokens.shape
    B_p = _round_up(max(B, 8), 8)                                   # sublane dim
    E_p = prepared["w_in"].shape[0]
    H_p = prepared["w_in"].shape[1]
    V_p = prepared["fc_w"].shape[1]

    # Per-call glue: embedding gather (already bf16, lane-padded), time-major, batch padded.
    # Padded batch rows compute tanh(bias) != 0 in-kernel but are row-independent & sliced off.
    x_emb = jnp.take(prepared["embedding"], tokens, axis=0)         # (B, T, E_p) bf16
    x_tm = jnp.transpose(x_emb, (1, 0, 2))                          # (T, B, E_p)
    x_tm = jnp.pad(x_tm, ((0, 0), (0, B_p - B), (0, 0)))
    x_flat = x_tm.reshape(T * B_p, E_p)

    kernel_inputs = [x_flat, prepared["w_in"], prepared["bias0"], prepared["w_big"]]
    if num_layers > 1:
        kernel_inputs.append(prepared["bias_rest"])
    kernel_inputs += [prepared["fc_w"], prepared["fc_b"]]

    kernel = _make_wavefront_kernel(num_layers, B_p, T, H_p)

    vmem = pltpu.MemorySpace.VMEM
    out_p = pl.pallas_call(
        kernel,
        out_shape=jax.ShapeDtypeStruct((B_p, V_p), jnp.float32),
        in_specs=[pl.BlockSpec(memory_space=vmem) for _ in kernel_inputs],
        out_specs=pl.BlockSpec(memory_space=vmem),
    )(*kernel_inputs)

    return out_p[:B, :vocab_size]


def _reference_forward(tokens, params, num_layers):
    """Pure-JAX reference mirroring the kernel's numerics (bf16 MXU operands, f32 accum/tanh)."""
    x = jnp.take(params["embedding"], tokens, axis=0)               # (B, T, E)
    B, T, _ = x.shape
    seq = x
    h = None
    for layer in range(num_layers):
        w_ih, w_hh, b_ih, b_hh = params["rnn"][layer]
        w_ih_t = w_ih.T.astype(jnp.bfloat16)
        w_hh_t = w_hh.T.astype(jnp.bfloat16)
        bias = (b_ih + b_hh).astype(jnp.float32)
        h = jnp.zeros((B, w_hh.shape[0]), jnp.float32)
        outs = []
        for t in range(T):
            xt = seq[:, t, :].astype(jnp.bfloat16)
            pre = (jnp.dot(xt, w_ih_t, preferred_element_type=jnp.float32) + bias
                   + jnp.dot(h.astype(jnp.bfloat16), w_hh_t, preferred_element_type=jnp.float32))
            h = jnp.tanh(pre)
            outs.append(h)
        seq = jnp.stack(outs, axis=1).astype(jnp.float32)
    return (jnp.dot(h.astype(jnp.bfloat16), params["fc_w"].T.astype(jnp.bfloat16),
                    preferred_element_type=jnp.float32) + params["fc_b"])


if __name__ == "__main__":
    # Small shapes consistent with the module:
    vocab_size = 64
    embed_size = 32
    hidden_size = 32
    num_layers = 2
    B, T = 2, 8

    key = jax.random.PRNGKey(0)
    pkey, tkey = jax.random.split(key)
    params = init_params(pkey, vocab_size, embed_size, hidden_size, num_layers)
    tokens = jax.random.randint(tkey, (B, T), 0, vocab_size, dtype=jnp.int32)

    prepared, dims = prepare_params(params)       # one-time weight prep (kept off the hot path)

    logits = rnn_model_forward(tokens, prepared,
                               num_layers=dims["num_layers"],
                               vocab_size=dims["vocab_size"])
    jax.block_until_ready(logits)

    ref = _reference_forward(tokens, params, num_layers)
    assert logits.shape == (B, vocab_size)
    assert jnp.allclose(logits, ref, rtol=1e-2, atol=1e-2), "Pallas kernel mismatch vs reference"

    print("KERNEL_OK")
</pallas_src>

<mosaic_0001>
module attributes {stable_mosaic.version = 11 : i64} {
  func.func @kernel(%arg0: memref<64x128xbf16, #tpu.memory_space<vmem>>, %arg1: memref<128x128xbf16, #tpu.memory_space<vmem>>, %arg2: memref<1x128xf32, #tpu.memory_space<vmem>>, %arg3: memref<256x256xbf16, #tpu.memory_space<vmem>>, %arg4: memref<1x128xf32, #tpu.memory_space<vmem>>, %arg5: memref<128x128xbf16, #tpu.memory_space<vmem>>, %arg6: memref<1x128xf32, #tpu.memory_space<vmem>>, %arg7: memref<8x128xf32, #tpu.memory_space<vmem>>) attributes {dimension_semantics = [], scalar_prefetch = 0 : i64, scratch_operands = 0 : i64, tpu.core_type = #tpu.core_type<tc>} {
    %c0 = arith.constant 0 : index
    %c0_0 = arith.constant 0 : index
    %0 = vector.load %arg0[%c0, %c0_0] : memref<64x128xbf16, #tpu.memory_space<vmem>>, vector<64x128xbf16>
    %c0_1 = arith.constant 0 : index
    %c0_2 = arith.constant 0 : index
    %1 = vector.load %arg1[%c0_1, %c0_2] : memref<128x128xbf16, #tpu.memory_space<vmem>>, vector<128x128xbf16>
    %cst = arith.constant dense<0.000000e+00> : vector<64x128xf32>
    %2 = tpu.matmul %0, %1, %cst {dimension_numbers = #tpu.dot_dimension_numbers<[1], [0], [0], [1], [0, 0, 1, 1], [], []>} : vector<64x128xbf16>, vector<128x128xbf16>, vector<64x128xf32> -> vector<64x128xf32>
    %c0_3 = arith.constant 0 : index
    %c0_4 = arith.constant 0 : index
    %3 = vector.load %arg2[%c0_3, %c0_4] : memref<1x128xf32, #tpu.memory_space<vmem>>, vector<1x128xf32>
    %4 = vector.broadcast %3 : vector<1x128xf32> to vector<64x128xf32>
    %5 = arith.addf %2, %4 : vector<64x128xf32>
    %cst_5 = arith.constant 0.000000e+00 : f32
    %6 = vector.broadcast %cst_5 : f32 to vector<8x128xf32>
    %7 = tpu.concatenate %5, %6 in 0 : vector<64x128xf32>, vector<8x128xf32> -> vector<72x128xf32>
    %c0_6 = arith.constant 0 : index
    %c0_7 = arith.constant 0 : index
    %8 = vector.load %arg4[%c0_6, %c0_7] : memref<1x128xf32, #tpu.memory_space<vmem>>, vector<1x128xf32>
    %cst_8 = arith.constant 0.000000e+00 : f32
    %9 = vector.broadcast %cst_8 : f32 to vector<8x128xf32>
    %10 = vector.shape_cast %8 : vector<1x128xf32> to vector<1x128xf32>
    %11 = vector.broadcast %10 : vector<1x128xf32> to vector<64x128xf32>
    %12 = tpu.concatenate %9, %11 in 0 : vector<8x128xf32>, vector<64x128xf32> -> vector<72x128xf32>
    %13 = tpu.concatenate %7, %12 in 1 : vector<72x128xf32>, vector<72x128xf32> -> vector<72x256xf32>
    %c0_9 = arith.constant 0 : index
    %c0_10 = arith.constant 0 : index
    %14 = vector.load %arg3[%c0_9, %c0_10] : memref<256x256xbf16, #tpu.memory_space<vmem>>, vector<256x256xbf16>
    %cst_11 = arith.constant 0.000000e+00 : f32
    %15 = vector.broadcast %cst_11 : f32 to vector<8x256xf32>
    %16 = vector.extract_strided_slice %13 {offsets = [0, 0], sizes = [8, 256], strides = [1, 1]} : vector<72x256xf32> to vector<8x256xf32>
    %17 = arith.truncf %15 : vector<8x256xf32> to vector<8x256xbf16>
    %cst_12 = arith.constant dense<0.000000e+00> : vector<8x256xf32>
    %18 = tpu.matmul %17, %14, %cst_12 {dimension_numbers = #tpu.dot_dimension_numbers<[1], [0], [0], [1], [0, 0, 1, 1], [], []>} : vector<8x256xbf16>, vector<256x256xbf16>, vector<8x256xf32> -> vector<8x256xf32>
    %19 = arith.addf %16, %18 : vector<8x256xf32>
    %20 = math.tanh %19 : vector<8x256xf32>
    %21 = vector.extract_strided_slice %13 {offsets = [8, 0], sizes = [8, 256], strides = [1, 1]} : vector<72x256xf32> to vector<8x256xf32>
    %22 = arith.truncf %20 : vector<8x256xf32> to vector<8x256xbf16>
    %cst_13 = arith.constant dense<0.000000e+00> : vector<8x256xf32>
    %23 = tpu.matmul %22, %14, %cst_13 {dimension_numbers = #tpu.dot_dimension_numbers<[1], [0], [0], [1], [0, 0, 1, 1], [], []>} : vector<8x256xbf16>, vector<256x256xbf16>, vector<8x256xf32> -> vector<8x256xf32>
    %24 = arith.addf %21, %23 : vector<8x256xf32>
    %25 = math.tanh %24 : vector<8x256xf32>
    %26 = vector.extract_strided_slice %13 {offsets = [16, 0], sizes = [8, 256], strides = [1, 1]} : vector<72x256xf32> to vector<8x256xf32>
    %27 = arith.truncf %25 : vector<8x256xf32> to vector<8x256xbf16>
    %cst_14 = arith.constant dense<0.000000e+00> : vector<8x256xf32>
    %28 = tpu.matmul %27, %14, %cst_14 {dimension_numbers = #tpu.dot_dimension_numbers<[1], [0], [0], [1], [0, 0, 1, 1], [], []>} : vector<8x256xbf16>, vector<256x256xbf16>, vector<8x256xf32> -> vector<8x256xf32>
    %29 = arith.addf %26, %28 : vector<8x256xf32>
    %30 = math.tanh %29 : vector<8x256xf32>
    %31 = vector.extract_strided_slice %13 {offsets = [24, 0], sizes = [8, 256], strides = [1, 1]} : vector<72x256xf32> to vector<8x256xf32>
    %32 = arith.truncf %30 : vector<8x256xf32> to vector<8x256xbf16>
    %cst_15 = arith.constant dense<0.000000e+00> : vector<8x256xf32>
    %33 = tpu.matmul %32, %14, %cst_15 {dimension_numbers = #tpu.dot_dimension_numbers<[1], [0], [0], [1], [0, 0, 1, 1], [], []>} : vector<8x256xbf16>, vector<256x256xbf16>, vector<8x256xf32> -> vector<8x256xf32>
    %34 = arith.addf %31, %33 : vector<8x256xf32>
    %35 = math.tanh %34 : vector<8x256xf32>
    %36 = vector.extract_strided_slice %13 {offsets = [32, 0], sizes = [8, 256], strides = [1, 1]} : vector<72x256xf32> to vector<8x256xf32>
    %37 = arith.truncf %35 : vector<8x256xf32> to vector<8x256xbf16>
    %cst_16 = arith.constant dense<0.000000e+00> : vector<8x256xf32>
    %38 = tpu.matmul %37, %14, %cst_16 {dimension_numbers = #tpu.dot_dimension_numbers<[1], [0], [0], [1], [0, 0, 1, 1], [], []>} : vector<8x256xbf16>, vector<256x256xbf16>, vector<8x256xf32> -> vector<8x256xf32>
    %39 = arith.addf %36, %38 : vector<8x256xf32>
    %40 = math.tanh %39 : vector<8x256xf32>
    %41 = vector.extract_strided_slice %13 {offsets = [40, 0], sizes = [8, 256], strides = [1, 1]} : vector<72x256xf32> to vector<8x256xf32>
    %42 = arith.truncf %40 : vector<8x256xf32> to vector<8x256xbf16>
    %cst_17 = arith.constant dense<0.000000e+00> : vector<8x256xf32>
    %43 = tpu.matmul %42, %14, %cst_17 {dimension_numbers = #tpu.dot_dimension_numbers<[1], [0], [0], [1], [0, 0, 1, 1], [], []>} : vector<8x256xbf16>, vector<256x256xbf16>, vector<8x256xf32> -> vector<8x256xf32>
    %44 = arith.addf %41, %43 : vector<8x256xf32>
    %45 = math.tanh %44 : vector<8x256xf32>
    %46 = vector.extract_strided_slice %13 {offsets = [48, 0], sizes = [8, 256], strides = [1, 1]} : vector<72x256xf32> to vector<8x256xf32>
    %47 = arith.truncf %45 : vector<8x256xf32> to vector<8x256xbf16>
    %cst_18 = arith.constant dense<0.000000e+00> : vector<8x256xf32>
    %48 = tpu.matmul %47, %14, %cst_18 {dimension_numbers = #tpu.dot_dimension_numbers<[1], [0], [0], [1], [0, 0, 1, 1], [], []>} : vector<8x256xbf16>, vector<256x256xbf16>, vector<8x256xf32> -> vector<8x256xf32>
    %49 = arith.addf %46, %48 : vector<8x256xf32>
    %50 = math.tanh %49 : vector<8x256xf32>
    %51 = vector.extract_strided_slice %13 {offsets = [56, 0], sizes = [8, 256], strides = [1, 1]} : vector<72x256xf32> to vector<8x256xf32>
    %52 = arith.truncf %50 : vector<8x256xf32> to vector<8x256xbf16>
    %cst_19 = arith.constant dense<0.000000e+00> : vector<8x256xf32>
    %53 = tpu.matmul %52, %14, %cst_19 {dimension_numbers = #tpu.dot_dimension_numbers<[1], [0], [0], [1], [0, 0, 1, 1], [], []>} : vector<8x256xbf16>, vector<256x256xbf16>, vector<8x256xf32> -> vector<8x256xf32>
    %54 = arith.addf %51, %53 : vector<8x256xf32>
    %55 = math.tanh %54 : vector<8x256xf32>
    %56 = vector.extract_strided_slice %13 {offsets = [64, 0], sizes = [8, 256], strides = [1, 1]} : vector<72x256xf32> to vector<8x256xf32>
    %57 = arith.truncf %55 : vector<8x256xf32> to vector<8x256xbf16>
    %cst_20 = arith.constant dense<0.000000e+00> : vector<8x256xf32>
    %58 = tpu.matmul %57, %14, %cst_20 {dimension_numbers = #tpu.dot_dimension_numbers<[1], [0], [0], [1], [0, 0, 1, 1], [], []>} : vector<8x256xbf16>, vector<256x256xbf16>, vector<8x256xf32> -> vector<8x256xf32>
    %59 = arith.addf %56, %58 : vector<8x256xf32>
    %60 = math.tanh %59 : vector<8x256xf32>
    %61 = vector.extract_strided_slice %60 {offsets = [0, 128], sizes = [8, 128], strides = [1, 1]} : vector<8x256xf32> to vector<8x128xf32>
    %62 = arith.truncf %61 : vector<8x128xf32> to vector<8x128xbf16>
    %c0_21 = arith.constant 0 : index
    %c0_22 = arith.constant 0 : index
    %63 = vector.load %arg5[%c0_21, %c0_22] : memref<128x128xbf16, #tpu.memory_space<vmem>>, vector<128x128xbf16>
    %cst_23 = arith.constant dense<0.000000e+00> : vector<8x128xf32>
    %64 = tpu.matmul %62, %63, %cst_23 {dimension_numbers = #tpu.dot_dimension_numbers<[1], [0], [0], [1], [0, 0, 1, 1], [], []>} : vector<8x128xbf16>, vector<128x128xbf16>, vector<8x128xf32> -> vector<8x128xf32>
    %c0_24 = arith.constant 0 : index
    %c0_25 = arith.constant 0 : index
    %65 = vector.load %arg6[%c0_24, %c0_25] : memref<1x128xf32, #tpu.memory_space<vmem>>, vector<1x128xf32>
    %66 = vector.broadcast %65 : vector<1x128xf32> to vector<8x128xf32>
    %67 = arith.addf %64, %66 : vector<8x128xf32>
    %c0_26 = arith.constant 0 : index
    %c0_27 = arith.constant 0 : index
    %68 = vector.load %arg7[%c0_26, %c0_27] : memref<8x128xf32, #tpu.memory_space<vmem>>, vector<8x128xf32>
    tpu.vector_store %arg7[%c0_26, %c0_27], %67 {strides = array<i32>} : memref<8x128xf32, #tpu.memory_space<vmem>>, vector<8x128xf32>,
    return
  }
}

</mosaic_0001>

<llo_original>
// kernel: rnn_model_forward.1
$region0: #{rnn_model_forward.1}
  #allocation0 [shape = 'u32[]', space=smem, size = 0x4, offset = 0x4, fixed_abs, tag = 'smem constant byte address 0x4 - core index']
  #allocation1 [shape = 'u32[144,128]{1,0:T(1,128)}', space=vmem, size = 0x12000, scoped, tag = 'internal scratch']
  %s0 = inlined_call_operand.vmem [shape: bf16[64,128], index: 0, kind: input, shape index: {}]
  %s1 = inlined_call_operand.vmem [shape: bf16[128,128], index: 1, kind: input, shape index: {}]
  %s2 = inlined_call_operand.vmem [shape: f32[1,128], index: 2, kind: input, shape index: {}]
  %s3 = inlined_call_operand.hbm [shape: bf16[256,256], index: 3, kind: input, shape index: {}]
  %s4 = inlined_call_operand.vmem [shape: f32[1,128], index: 4, kind: input, shape index: {}]
  %s5 = inlined_call_operand.vmem [shape: bf16[128,128], index: 5, kind: input, shape index: {}]
  %s6 = inlined_call_operand.vmem [shape: f32[1,128], index: 6, kind: input, shape index: {}]
  %s7 = inlined_call_operand.vmem [shape: f32[8,128], index: 7, kind: output, shape index: {}]
  %s8 = sld [smem:[#allocation0]]
  $region42: #{rnn_model_forward.1} parent=0
    _
  %s10 = ssub.s32 1, %s8
  %s11 = scalar_select 0, %s10, %s8
  $region1: #{rnn_model_forward.1} parent=0
    #allocation2 [shape = 'u8[131072]{0}', space=vmem, size = 0x20000, scoped, tag = 'input window, operand 3, single buffered']
    #allocation3 [shape = 's32[1]{0}', space=sflag, size = 0x4, scoped, tag = 'scoped memory for rnn_model_forward.1']
    %12 = vsyncpa [#allocation3], 0
    // Predicated region
    $region2: #{rnn_model_forward.1} parent=1 // pred_check
      _
    $region3: #{rnn_model_forward.1} parent=1 // pred_check_branch
      %14 = sbr.rel (0) target = $region5
    $region4: #{rnn_model_forward.1} parent=1 // pred_region
      _
    $region5: #{rnn_model_forward.1} parent=1 // pred_fallthru
      _
    // Predicated region
    $region6: #{rnn_model_forward.1} parent=1 // pred_check
      _
    $region7: #{rnn_model_forward.1} parent=1 // pred_check_branch
      %16 = sbr.rel (0) target = $region9
    $region8: #{rnn_model_forward.1} parent=1 // pred_region
      _
    $region9: #{rnn_model_forward.1} parent=1 // pred_fallthru
      _
    // Predicated region
    $region10: #{rnn_model_forward.1} parent=1 // pred_check
      _
    $region11: #{rnn_model_forward.1} parent=1 // pred_check_branch
      %18 = sbr.rel (0) target = $region13
    $region12: #{rnn_model_forward.1} parent=1 // pred_region
      _
    $region13: #{rnn_model_forward.1} parent=1 // pred_fallthru
      _
    // Predicated region
    $region14: #{rnn_model_forward.1} parent=1 // pred_check
      _
    $region15: #{rnn_model_forward.1} parent=1 // pred_check_branch
      %20 = sbr.rel (0) target = $region17
    $region16: #{rnn_model_forward.1} parent=1 // pred_region
      %s22 = ssub.s32 4096, 4096
      %23 = vsyncadd [#allocation3], %s22
      %s24 = sshll.u32 [#allocation2], 4
      %s25 = int_to_ptr.vmem [resolvable:$true] %s24
      %30 = dma.hbm_to_vmem [thread:$0]  %s3, 4096, %s25, [#allocation3], 128, 128, 8
    $region17: #{rnn_model_forward.1} parent=1 // pred_fallthru
      _
    // Predicated region
    $region18: #{rnn_model_forward.1} parent=1 // pred_check
      _
    $region19: #{rnn_model_forward.1} parent=1 // pred_check_branch
      %32 = sbr.rel (0) target = $region21
    $region20: #{rnn_model_forward.1} parent=1 // pred_region
      _
    $region21: #{rnn_model_forward.1} parent=1 // pred_fallthru
      _
    // Predicated region
    $region22: #{rnn_model_forward.1} parent=1 // pred_check
      _
    $region23: #{rnn_model_forward.1} parent=1 // pred_check_branch
      %34 = sbr.rel (0) target = $region25
    $region24: #{rnn_model_forward.1} parent=1 // pred_region
      _
    $region25: #{rnn_model_forward.1} parent=1 // pred_fallthru
      _
    // Predicated region
    $region26: #{rnn_model_forward.1} parent=1 // pred_check
      _
    $region27: #{rnn_model_forward.1} parent=1 // pred_check_branch
      %36 = sbr.rel (0) target = $region29
    $region28: #{rnn_model_forward.1} parent=1 // pred_region
      _
    $region29: #{rnn_model_forward.1} parent=1 // pred_fallthru
      _
    // Predicated region
    $region30: #{rnn_model_forward.1} parent=1 // pred_check
      _
    $region31: #{rnn_model_forward.1} parent=1 // pred_check_branch
      %38 = sbr.rel (0) target = $region33
    $region32: #{rnn_model_forward.1} parent=1 // pred_region
      %39 = dma.done [#allocation3], 4096
    $region33: #{rnn_model_forward.1} parent=1 // pred_fallthru
      _
    %v41 = vld [vmem:[%s0] sm:$0xf]
    %v42 = vld [vmem:[%s0 + $0x4] sm:$0xf]
    %v43 = vld [vmem:[%s0 + $0x8] sm:$0xf]
    %v44 = vld [vmem:[%s0 + $0xc] sm:$0xf]
    %v45 = vld [vmem:[%s0 + $0x10] sm:$0xf]
    %v46 = vld [vmem:[%s0 + $0x14] sm:$0xf]
    %v47 = vld [vmem:[%s0 + $0x18] sm:$0xf]
    %v48 = vld [vmem:[%s0 + $0x1c] sm:$0xf]
    %v49 = vld [vmem:[%s1] sm:$0xf]
    %v50 = vld [vmem:[%s1 + $0x4] sm:$0xf]
    %v51 = vld [vmem:[%s1 + $0x8] sm:$0xf]
    %v52 = vld [vmem:[%s1 + $0xc] sm:$0xf]
    %v53 = vld [vmem:[%s1 + $0x10] sm:$0xf]
    %v54 = vld [vmem:[%s1 + $0x14] sm:$0xf]
    %v55 = vld [vmem:[%s1 + $0x18] sm:$0xf]
    %v56 = vld [vmem:[%s1 + $0x1c] sm:$0xf]
    %v57 = vld [vmem:[%s1 + $0x20] sm:$0xf]
    %v58 = vld [vmem:[%s1 + $0x24] sm:$0xf]
    %v59 = vld [vmem:[%s1 + $0x28] sm:$0xf]
    %v60 = vld [vmem:[%s1 + $0x2c] sm:$0xf]
    %v61 = vld [vmem:[%s1 + $0x30] sm:$0xf]
    %v62 = vld [vmem:[%s1 + $0x34] sm:$0xf]
    %v63 = vld [vmem:[%s1 + $0x38] sm:$0xf]
    %v64 = vld [vmem:[%s1 + $0x3c] sm:$0xf]
    %v65 = vld [vmem:[%s2] sm:$0x1]
    %v67 = vlaneseq
    %v68 = vshrl.u32 %v67, 7
    %v69 = vsub.s32 0, %v68
    %v70 = vrot.slane %v65, %v69
    %v80 = vunpack.c.l.b16 %v41
    %v81 = vunpack.c.l.b16 %v42
    %v82 = vunpack.c.l.b16 %v43
    %v83 = vunpack.c.l.b16 %v44
    %v84 = vunpack.c.l.b16 %v45
    %v85 = vunpack.c.l.b16 %v46
    %v86 = vunpack.c.l.b16 %v47
    %v87 = vunpack.c.l.b16 %v48
    %v88 = vpack.c.b16 %v81, %v80
    %v89 = vpack.c.b16 %v83, %v82
    %v90 = vpack.c.b16 %v85, %v84
    %v91 = vpack.c.b16 %v87, %v86
    %v112 = vunpack.c.l.b16 %v49
    %v113 = vunpack.c.l.b16 %v50
    %v114 = vunpack.c.l.b16 %v51
    %v115 = vunpack.c.l.b16 %v52
    %v116 = vunpack.c.l.b16 %v53
    %v117 = vunpack.c.l.b16 %v54
    %v118 = vunpack.c.l.b16 %v55
    %v119 = vunpack.c.l.b16 %v56
    %v120 = vunpack.c.l.b16 %v57
    %v121 = vunpack.c.l.b16 %v58
    %v122 = vunpack.c.l.b16 %v59
    %v123 = vunpack.c.l.b16 %v60
    %v124 = vunpack.c.l.b16 %v61
    %v125 = vunpack.c.l.b16 %v62
    %v126 = vunpack.c.l.b16 %v63
    %v127 = vunpack.c.l.b16 %v64
    %v128 = vpack.c.b16 %v113, %v112
    %v129 = vpack.c.b16 %v115, %v114
    %v130 = vpack.c.b16 %v117, %v116
    %v131 = vpack.c.b16 %v119, %v118
    %v132 = vpack.c.b16 %v121, %v120
    %v133 = vpack.c.b16 %v123, %v122
    %v134 = vpack.c.b16 %v125, %v124
    %v135 = vpack.c.b16 %v127, %v126
    %144 = vmatprep.subr.bf16.mxu0 0
    %145 = vmatpush1.bf16.msra.mxu0 %v135
    %146 = vmatprep.subr.bf16.mxu0 0
    %147 = vmatpush1.bf16.msra.mxu0 %v134
    %148 = vmatprep.subr.bf16.mxu0 0
    %149 = vmatpush1.bf16.msra.mxu0 %v133
    %150 = vmatprep.subr.bf16.mxu0 0
    %151 = vmatpush1.bf16.msra.mxu0 %v132
    %152 = vmatprep.subr.bf16.mxu0 0
    %153 = vmatpush1.bf16.msra.mxu0 %v131
    %154 = vmatprep.subr.bf16.mxu0 0
    %155 = vmatpush1.bf16.msra.mxu0 %v130
    %156 = vmatprep.subr.bf16.mxu0 0
    %157 = vmatpush1.bf16.msra.mxu0 %v129
    %158 = vmatprep.subr.bf16.mxu0 0
    %159 = vmatpush1.bf16.msra.mxu0 %v128
    %160 = vmatprep.subr.bf16.mxu0 0
    %161 = vmatpush2.bf16.msra.mxu0 0
    %162 = vmatprep.subr.bf16.mxu0 0
    %163 = vmatpush2.bf16.msra.mxu0 0
    %164 = vmatprep.subr.bf16.mxu0 0
    %165 = vmatpush2.bf16.msra.mxu0 0
    %166 = vmatprep.subr.bf16.mxu0 0
    %167 = vmatpush2.bf16.msra.mxu0 0
    %168 = vmatprep.subr.bf16.mxu0 0
    %169 = vmatpush2.bf16.msra.mxu0 0
    %170 = vmatprep.subr.bf16.mxu0 0
    %171 = vmatpush2.bf16.msra.mxu0 0
    %172 = vmatprep.subr.bf16.mxu0 0
    %173 = vmatpush2.bf16.msra.mxu0 0
    %174 = vmatprep.subr.bf16.mxu0 0
    %175 = vmatpush2.bf16.msra.mxu0 0
    %176 = vmatprep.mubr.bf16.mxu0 0
    %177 = vmatmul.mubr.bf16.gmra.mxu0 %v88
    %v178 = vpop.f32.mrf.mxu0
    %v179 = vadd.f32 %v70, %v178
    %v180 = vpop.f32.mrf.mxu0
    %v181 = vpop.f32.mrf.mxu0
    %v182 = vadd.f32 %v70, %v181
    %v183 = vpop.f32.mrf.mxu0
    %184 = vmatprep.mubr.bf16.mxu0 0
    %185 = vmatmul.mubr.bf16.gmra.mxu0 %v89
    %v186 = vpop.f32.mrf.mxu0
    %v187 = vadd.f32 %v70, %v186
    %v188 = vpop.f32.mrf.mxu0
    %v189 = vpop.f32.mrf.mxu0
    %v190 = vadd.f32 %v70, %v189
    %v191 = vpop.f32.mrf.mxu0
    %192 = vmatprep.mubr.bf16.mxu0 0
    %193 = vmatmul.mubr.bf16.gmra.mxu0 %v90
    %v194 = vpop.f32.mrf.mxu0
    %v195 = vadd.f32 %v70, %v194
    %v196 = vpop.f32.mrf.mxu0
    %v197 = vpop.f32.mrf.mxu0
    %v198 = vadd.f32 %v70, %v197
    %v199 = vpop.f32.mrf.mxu0
    %200 = vmatprep.mubr.bf16.mxu0 0
    %201 = vmatmul.mubr.bf16.gmra.mxu0 %v91
    %v202 = vpop.f32.mrf.mxu0
    %v203 = vadd.f32 %v70, %v202
    %v204 = vpop.f32.mrf.mxu0
    %v205 = vpop.f32.mrf.mxu0
    %v206 = vadd.f32 %v70, %v205
    %v207 = vpop.f32.mrf.mxu0
    %208 = vdwg.mxu0
    %v209 = vld [vmem:[%s4] sm:$0x1]
    %v211 = vlaneseq
    %v212 = vshrl.u32 %v211, 7
    %v213 = vsub.s32 0, %v212
    %v214 = vrot.slane %v209, %v213
    %v216 = vld [vmem:[#allocation2] sm:$0xff]
    %v217 = vld [vmem:[#allocation2 + $0x8] sm:$0xff]
    %v218 = vld [vmem:[#allocation2 + $0x10] sm:$0xff]
    %v219 = vld [vmem:[#allocation2 + $0x18] sm:$0xff]
    %v220 = vld [vmem:[#allocation2 + $0x20] sm:$0xff]
    %v221 = vld [vmem:[#allocation2 + $0x28] sm:$0xff]
    %v222 = vld [vmem:[#allocation2 + $0x30] sm:$0xff]
    %v223 = vld [vmem:[#allocation2 + $0x38] sm:$0xff]
    %v224 = vld [vmem:[#allocation2 + $0x40] sm:$0xff]
    %v225 = vld [vmem:[#allocation2 + $0x48] sm:$0xff]
    %v226 = vld [vmem:[#allocation2 + $0x50] sm:$0xff]
    %v227 = vld [vmem:[#allocation2 + $0x58] sm:$0xff]
    %v228 = vld [vmem:[#allocation2 + $0x60] sm:$0xff]
    %v229 = vld [vmem:[#allocation2 + $0x68] sm:$0xff]
    %v230 = vld [vmem:[#allocation2 + $0x70] sm:$0xff]
    %v231 = vld [vmem:[#allocation2 + $0x78] sm:$0xff]
    %v232 = vld [vmem:[#allocation2 + $0x80] sm:$0xff]
    %v233 = vld [vmem:[#allocation2 + $0x88] sm:$0xff]
    %v234 = vld [vmem:[#allocation2 + $0x90] sm:$0xff]
    %v235 = vld [vmem:[#allocation2 + $0x98] sm:$0xff]
    %v236 = vld [vmem:[#allocation2 + $0xa0] sm:$0xff]
    %v237 = vld [vmem:[#allocation2 + $0xa8] sm:$0xff]
    %v238 = vld [vmem:[#allocation2 + $0xb0] sm:$0xff]
    %v239 = vld [vmem:[#allocation2 + $0xb8] sm:$0xff]
    %v240 = vld [vmem:[#allocation2 + $0xc0] sm:$0xff]
    %v241 = vld [vmem:[#allocation2 + $0xc8] sm:$0xff]
    %v242 = vld [vmem:[#allocation2 + $0xd0] sm:$0xff]
    %v243 = vld [vmem:[#allocation2 + $0xd8] sm:$0xff]
    %v244 = vld [vmem:[#allocation2 + $0xe0] sm:$0xff]
    %v245 = vld [vmem:[#allocation2 + $0xe8] sm:$0xff]
    %v246 = vld [vmem:[#allocation2 + $0xf0] sm:$0xff]
    %v247 = vld [vmem:[#allocation2 + $0xf8] sm:$0xff]
    %v280 = vunpack.c.l.b16 %v216
    %v281 = vunpack.c.h.b16 %v216
    %v282 = vunpack.c.l.b16 %v217
    %v283 = vunpack.c.h.b16 %v217
    %v284 = vunpack.c.l.b16 %v218
    %v285 = vunpack.c.h.b16 %v218
    %v286 = vunpack.c.l.b16 %v219
    %v287 = vunpack.c.h.b16 %v219
    %v288 = vunpack.c.l.b16 %v220
    %v289 = vunpack.c.h.b16 %v220
    %v290 = vunpack.c.l.b16 %v221
    %v291 = vunpack.c.h.b16 %v221
    %v292 = vunpack.c.l.b16 %v222
    %v293 = vunpack.c.h.b16 %v222
    %v294 = vunpack.c.l.b16 %v223
    %v295 = vunpack.c.h.b16 %v223
    %v296 = vunpack.c.l.b16 %v224
    %v297 = vunpack.c.h.b16 %v224
    %v298 = vunpack.c.l.b16 %v225
    %v299 = vunpack.c.h.b16 %v225
    %v300 = vunpack.c.l.b16 %v226
    %v301 = vunpack.c.h.b16 %v226
    %v302 = vunpack.c.l.b16 %v227
    %v303 = vunpack.c.h.b16 %v227
    %v304 = vunpack.c.l.b16 %v228
    %v305 = vunpack.c.h.b16 %v228
    %v306 = vunpack.c.l.b16 %v229
    %v307 = vunpack.c.h.b16 %v229
    %v308 = vunpack.c.l.b16 %v230
    %v309 = vunpack.c.h.b16 %v230
    %v310 = vunpack.c.l.b16 %v231
    %v311 = vunpack.c.h.b16 %v231
    %v312 = vunpack.c.l.b16 %v232
    %v313 = vunpack.c.h.b16 %v232
    %v314 = vunpack.c.l.b16 %v233
    %v315 = vunpack.c.h.b16 %v233
    %v316 = vunpack.c.l.b16 %v234
    %v317 = vunpack.c.h.b16 %v234
    %v318 = vunpack.c.l.b16 %v235
    %v319 = vunpack.c.h.b16 %v235
    %v320 = vunpack.c.l.b16 %v236
    %v321 = vunpack.c.h.b16 %v236
    %v322 = vunpack.c.l.b16 %v237
    %v323 = vunpack.c.h.b16 %v237
    %v324 = vunpack.c.l.b16 %v238
    %v325 = vunpack.c.h.b16 %v238
    %v326 = vunpack.c.l.b16 %v239
    %v327 = vunpack.c.h.b16 %v239
    %v328 = vunpack.c.l.b16 %v240
    %v329 = vunpack.c.h.b16 %v240
    %v330 = vunpack.c.l.b16 %v241
    %v331 = vunpack.c.h.b16 %v241
    %v332 = vunpack.c.l.b16 %v242
    %v333 = vunpack.c.h.b16 %v242
    %v334 = vunpack.c.l.b16 %v243
    %v335 = vunpack.c.h.b16 %v243
    %v336 = vunpack.c.l.b16 %v244
    %v337 = vunpack.c.h.b16 %v244
    %v338 = vunpack.c.l.b16 %v245
    %v339 = vunpack.c.h.b16 %v245
    %v340 = vunpack.c.l.b16 %v246
    %v341 = vunpack.c.h.b16 %v246
    %v342 = vunpack.c.l.b16 %v247
    %v343 = vunpack.c.h.b16 %v247
    %v344 = vpack.c.b16 %v282, %v280
    %v345 = vpack.c.b16 %v283, %v281
    %v346 = vpack.c.b16 %v286, %v284
    %v347 = vpack.c.b16 %v287, %v285
    %v348 = vpack.c.b16 %v290, %v288
    %v349 = vpack.c.b16 %v291, %v289
    %v350 = vpack.c.b16 %v294, %v292
    %v351 = vpack.c.b16 %v295, %v293
    %v352 = vpack.c.b16 %v298, %v296
    %v353 = vpack.c.b16 %v299, %v297
    %v354 = vpack.c.b16 %v302, %v300
    %v355 = vpack.c.b16 %v303, %v301
    %v356 = vpack.c.b16 %v306, %v304
    %v357 = vpack.c.b16 %v307, %v305
    %v358 = vpack.c.b16 %v310, %v308
    %v359 = vpack.c.b16 %v311, %v309
    %v360 = vpack.c.b16 %v314, %v312
    %v361 = vpack.c.b16 %v315, %v313
    %v362 = vpack.c.b16 %v318, %v316
    %v363 = vpack.c.b16 %v319, %v317
    %v364 = vpack.c.b16 %v322, %v320
    %v365 = vpack.c.b16 %v323, %v321
    %v366 = vpack.c.b16 %v326, %v324
    %v367 = vpack.c.b16 %v327, %v325
    %v368 = vpack.c.b16 %v330, %v328
    %v369 = vpack.c.b16 %v331, %v329
    %v370 = vpack.c.b16 %v334, %v332
    %v371 = vpack.c.b16 %v335, %v333
    %v372 = vpack.c.b16 %v338, %v336
    %v373 = vpack.c.b16 %v339, %v337
    %v374 = vpack.c.b16 %v342, %v340
    %v375 = vpack.c.b16 %v343, %v341
    %408 = vmatprep.subr.bf16.mxu0 %v359
    %409 = vmatpush1.bf16.msra.mxu0 %v358
    %410 = vmatprep.subr.bf16.mxu0 %v357
    %411 = vmatpush1.bf16.msra.mxu0 %v356
    %412 = vmatprep.subr.bf16.mxu0 %v355
    %413 = vmatpush1.bf16.msra.mxu0 %v354
    %414 = vmatprep.subr.bf16.mxu0 %v353
    %415 = vmatpush1.bf16.msra.mxu0 %v352
    %416 = vmatprep.subr.bf16.mxu0 %v351
    %417 = vmatpush1.bf16.msra.mxu0 %v350
    %418 = vmatprep.subr.bf16.mxu0 %v349
    %419 = vmatpush1.bf16.msra.mxu0 %v348
    %420 = vmatprep.subr.bf16.mxu0 %v347
    %421 = vmatpush1.bf16.msra.mxu0 %v346
    %422 = vmatprep.subr.bf16.mxu0 %v345
    %423 = vmatpush1.bf16.msra.mxu0 %v344
    %424 = vmatprep.subr.bf16.mxu0 %v375
    %425 = vmatpush2.bf16.msra.mxu0 %v374
    %426 = vmatprep.subr.bf16.mxu0 %v373
    %427 = vmatpush2.bf16.msra.mxu0 %v372
    %428 = vmatprep.subr.bf16.mxu0 %v371
    %429 = vmatpush2.bf16.msra.mxu0 %v370
    %430 = vmatprep.subr.bf16.mxu0 %v369
    %431 = vmatpush2.bf16.msra.mxu0 %v368
    %432 = vmatprep.subr.bf16.mxu0 %v367
    %433 = vmatpush2.bf16.msra.mxu0 %v366
    %434 = vmatprep.subr.bf16.mxu0 %v365
    %435 = vmatpush2.bf16.msra.mxu0 %v364
    %436 = vmatprep.subr.bf16.mxu0 %v363
    %437 = vmatpush2.bf16.msra.mxu0 %v362
    %438 = vmatprep.subr.bf16.mxu0 %v361
    %439 = vmatpush2.bf16.msra.mxu0 %v360
    %440 = vmatprep.mubr.bf16.mxu0 0
    %441 = vmatmul.mubr.bf16.gmra.mxu0 0
    %v442 = vpop.f32.mrf.mxu0
    %v443 = vadd.f32 0.0, %v442
    %v444 = vpop.f32.mrf.mxu0
    %v445 = vadd.f32 0.0, %v444
    %v446 = vpop.f32.mrf.mxu0
    %v447 = vpop.f32.mrf.mxu0
    %448 = vdwg.mxu0
    %v449 = vadd.f32 %v179, %v443
    %v450 = vadd.f32 %v445, 0.0
    %v451 = vtanh.pop %v449
    %v452 = vtanh.pop %v450
    %v453 = vpack.c.bf16 %v451, %v451
    %v454 = vpack.c.bf16 %v452, %v452
    %455 = vmatprep.subr.bf16.mxu0 %v359
    %456 = vmatpush1.bf16.msra.mxu0 %v358
    %457 = vmatprep.subr.bf16.mxu0 %v357
    %458 = vmatpush1.bf16.msra.mxu0 %v356
    %459 = vmatprep.subr.bf16.mxu0 %v355
    %460 = vmatpush1.bf16.msra.mxu0 %v354
    %461 = vmatprep.subr.bf16.mxu0 %v353
    %462 = vmatpush1.bf16.msra.mxu0 %v352
    %463 = vmatprep.subr.bf16.mxu0 %v351
    %464 = vmatpush1.bf16.msra.mxu0 %v350
    %465 = vmatprep.subr.bf16.mxu0 %v349
    %466 = vmatpush1.bf16.msra.mxu0 %v348
    %467 = vmatprep.subr.bf16.mxu0 %v347
    %468 = vmatpush1.bf16.msra.mxu0 %v346
    %469 = vmatprep.subr.bf16.mxu0 %v345
    %470 = vmatpush1.bf16.msra.mxu0 %v344
    %471 = vmatprep.subr.bf16.mxu0 %v375
    %472 = vmatpush2.bf16.msra.mxu0 %v374
    %473 = vmatprep.subr.bf16.mxu0 %v373
    %474 = vmatpush2.bf16.msra.mxu0 %v372
    %475 = vmatprep.subr.bf16.mxu0 %v371
    %476 = vmatpush2.bf16.msra.mxu0 %v370
    %477 = vmatprep.subr.bf16.mxu0 %v369
    %478 = vmatpush2.bf16.msra.mxu0 %v368
    %479 = vmatprep.subr.bf16.mxu0 %v367
    %480 = vmatpush2.bf16.msra.mxu0 %v366
    %481 = vmatprep.subr.bf16.mxu0 %v365
    %482 = vmatpush2.bf16.msra.mxu0 %v364
    %483 = vmatprep.subr.bf16.mxu0 %v363
    %484 = vmatpush2.bf16.msra.mxu0 %v362
    %485 = vmatprep.subr.bf16.mxu0 %v361
    %486 = vmatpush2.bf16.msra.mxu0 %v360
    %487 = vmatprep.mubr.bf16.mxu0 %v454
    %488 = vmatmul.mubr.bf16.gmra.mxu0 %v453
    %v489 = vpop.f32.mrf.mxu0
    %v490 = vadd.f32 0.0, %v489
    %v491 = vpop.f32.mrf.mxu0
    %v492 = vadd.f32 0.0, %v491
    %v493 = vpop.f32.mrf.mxu0
    %v494 = vpop.f32.mrf.mxu0
    %495 = vdwg.mxu0
    %v496 = vadd.f32 %v182, %v490
    %v497 = vadd.f32 %v214, %v492
    %v498 = vtanh.pop %v496
    %v499 = vtanh.pop %v497
    %v500 = vpack.c.bf16 %v498, %v498
    %v501 = vpack.c.bf16 %v499, %v499
    %502 = vmatprep.subr.bf16.mxu0 %v359
    %503 = vmatpush1.bf16.msra.mxu0 %v358
    %504 = vmatprep.subr.bf16.mxu0 %v357
    %505 = vmatpush1.bf16.msra.mxu0 %v356
    %506 = vmatprep.subr.bf16.mxu0 %v355
    %507 = vmatpush1.bf16.msra.mxu0 %v354
    %508 = vmatprep.subr.bf16.mxu0 %v353
    %509 = vmatpush1.bf16.msra.mxu0 %v352
    %510 = vmatprep.subr.bf16.mxu0 %v351
    %511 = vmatpush1.bf16.msra.mxu0 %v350
    %512 = vmatprep.subr.bf16.mxu0 %v349
    %513 = vmatpush1.bf16.msra.mxu0 %v348
    %514 = vmatprep.subr.bf16.mxu0 %v347
    %515 = vmatpush1.bf16.msra.mxu0 %v346
    %516 = vmatprep.subr.bf16.mxu0 %v345
    %517 = vmatpush1.bf16.msra.mxu0 %v344
    %518 = vmatprep.subr.bf16.mxu0 %v375
    %519 = vmatpush2.bf16.msra.mxu0 %v374
    %520 = vmatprep.subr.bf16.mxu0 %v373
    %521 = vmatpush2.bf16.msra.mxu0 %v372
    %522 = vmatprep.subr.bf16.mxu0 %v371
    %523 = vmatpush2.bf16.msra.mxu0 %v370
    %524 = vmatprep.subr.bf16.mxu0 %v369
    %525 = vmatpush2.bf16.msra.mxu0 %v368
    %526 = vmatprep.subr.bf16.mxu0 %v367
    %527 = vmatpush2.bf16.msra.mxu0 %v366
    %528 = vmatprep.subr.bf16.mxu0 %v365
    %529 = vmatpush2.bf16.msra.mxu0 %v364
    %530 = vmatprep.subr.bf16.mxu0 %v363
    %531 = vmatpush2.bf16.msra.mxu0 %v362
    %532 = vmatprep.subr.bf16.mxu0 %v361
    %533 = vmatpush2.bf16.msra.mxu0 %v360
    %534 = vmatprep.mubr.bf16.mxu0 %v501
    %535 = vmatmul.mubr.bf16.gmra.mxu0 %v500
    %v536 = vpop.f32.mrf.mxu0
    %v537 = vadd.f32 0.0, %v536
    %v538 = vpop.f32.mrf.mxu0
    %v539 = vadd.f32 0.0, %v538
    %v540 = vpop.f32.mrf.mxu0
    %v541 = vpop.f32.mrf.mxu0
    %542 = vdwg.mxu0
    %v543 = vadd.f32 %v187, %v537
    %v544 = vadd.f32 %v214, %v539
    %v545 = vtanh.pop %v543
    %v546 = vtanh.pop %v544
    %v547 = vpack.c.bf16 %v545, %v545
    %v548 = vpack.c.bf16 %v546, %v546
    %549 = vmatprep.subr.bf16.mxu0 %v359
    %550 = vmatpush1.bf16.msra.mxu0 %v358
    %551 = vmatprep.subr.bf16.mxu0 %v357
    %552 = vmatpush1.bf16.msra.mxu0 %v356
    %553 = vmatprep.subr.bf16.mxu0 %v355
    %554 = vmatpush1.bf16.msra.mxu0 %v354
    %555 = vmatprep.subr.bf16.mxu0 %v353
    %556 = vmatpush1.bf16.msra.mxu0 %v352
    %557 = vmatprep.subr.bf16.mxu0 %v351
    %558 = vmatpush1.bf16.msra.mxu0 %v350
    %559 = vmatprep.subr.bf16.mxu0 %v349
    %560 = vmatpush1.bf16.msra.mxu0 %v348
    %561 = vmatprep.subr.bf16.mxu0 %v347
    %562 = vmatpush1.bf16.msra.mxu0 %v346
    %563 = vmatprep.subr.bf16.mxu0 %v345
    %564 = vmatpush1.bf16.msra.mxu0 %v344
    %565 = vmatprep.subr.bf16.mxu0 %v375
    %566 = vmatpush2.bf16.msra.mxu0 %v374
    %567 = vmatprep.subr.bf16.mxu0 %v373
    %568 = vmatpush2.bf16.msra.mxu0 %v372
    %569 = vmatprep.subr.bf16.mxu0 %v371
    %570 = vmatpush2.bf16.msra.mxu0 %v370
    %571 = vmatprep.subr.bf16.mxu0 %v369
    %572 = vmatpush2.bf16.msra.mxu0 %v368
    %573 = vmatprep.subr.bf16.mxu0 %v367
    %574 = vmatpush2.bf16.msra.mxu0 %v366
    %575 = vmatprep.subr.bf16.mxu0 %v365
    %576 = vmatpush2.bf16.msra.mxu0 %v364
    %577 = vmatprep.subr.bf16.mxu0 %v363
    %578 = vmatpush2.bf16.msra.mxu0 %v362
    %579 = vmatprep.subr.bf16.mxu0 %v361
    %580 = vmatpush2.bf16.msra.mxu0 %v360
    %581 = vmatprep.mubr.bf16.mxu0 %v548
    %582 = vmatmul.mubr.bf16.gmra.mxu0 %v547
    %v583 = vpop.f32.mrf.mxu0
    %v584 = vadd.f32 0.0, %v583
    %v585 = vpop.f32.mrf.mxu0
    %v586 = vadd.f32 0.0, %v585
    %v587 = vpop.f32.mrf.mxu0
    %v588 = vpop.f32.mrf.mxu0
    %589 = vdwg.mxu0
    %v590 = vadd.f32 %v190, %v584
    %v591 = vadd.f32 %v214, %v586
    %v592 = vtanh.pop %v590
    %v593 = vtanh.pop %v591
    %v594 = vpack.c.bf16 %v592, %v592
    %v595 = vpack.c.bf16 %v593, %v593
    %596 = vmatprep.subr.bf16.mxu0 %v359
    %597 = vmatpush1.bf16.msra.mxu0 %v358
    %598 = vmatprep.subr.bf16.mxu0 %v357
    %599 = vmatpush1.bf16.msra.mxu0 %v356
    %600 = vmatprep.subr.bf16.mxu0 %v355
    %601 = vmatpush1.bf16.msra.mxu0 %v354
    %602 = vmatprep.subr.bf16.mxu0 %v353
    %603 = vmatpush1.bf16.msra.mxu0 %v352
    %604 = vmatprep.subr.bf16.mxu0 %v351
    %605 = vmatpush1.bf16.msra.mxu0 %v350
    %606 = vmatprep.subr.bf16.mxu0 %v349
    %607 = vmatpush1.bf16.msra.mxu0 %v348
    %608 = vmatprep.subr.bf16.mxu0 %v347
    %609 = vmatpush1.bf16.msra.mxu0 %v346
    %610 = vmatprep.subr.bf16.mxu0 %v345
    %611 = vmatpush1.bf16.msra.mxu0 %v344
    %612 = vmatprep.subr.bf16.mxu0 %v375
    %613 = vmatpush2.bf16.msra.mxu0 %v374
    %614 = vmatprep.subr.bf16.mxu0 %v373
    %615 = vmatpush2.bf16.msra.mxu0 %v372
    %616 = vmatprep.subr.bf16.mxu0 %v371
    %617 = vmatpush2.bf16.msra.mxu0 %v370
    %618 = vmatprep.subr.bf16.mxu0 %v369
    %619 = vmatpush2.bf16.msra.mxu0 %v368
    %620 = vmatprep.subr.bf16.mxu0 %v367
    %621 = vmatpush2.bf16.msra.mxu0 %v366
    %622 = vmatprep.subr.bf16.mxu0 %v365
    %623 = vmatpush2.bf16.msra.mxu0 %v364
    %624 = vmatprep.subr.bf16.mxu0 %v363
    %625 = vmatpush2.bf16.msra.mxu0 %v362
    %626 = vmatprep.subr.bf16.mxu0 %v361
    %627 = vmatpush2.bf16.msra.mxu0 %v360
    %628 = vmatprep.mubr.bf16.mxu0 %v595
    %629 = vmatmul.mubr.bf16.gmra.mxu0 %v594
    %v630 = vpop.f32.mrf.mxu0
    %v631 = vadd.f32 0.0, %v630
    %v632 = vpop.f32.mrf.mxu0
    %v633 = vadd.f32 0.0, %v632
    %v634 = vpop.f32.mrf.mxu0
    %v635 = vpop.f32.mrf.mxu0
    %636 = vdwg.mxu0
    %v637 = vadd.f32 %v195, %v631
    %v638 = vadd.f32 %v214, %v633
    %v639 = vtanh.pop %v637
    %v640 = vtanh.pop %v638
    %v641 = vpack.c.bf16 %v639, %v639
    %v642 = vpack.c.bf16 %v640, %v640
    %643 = vmatprep.subr.bf16.mxu0 %v359
    %644 = vmatpush1.bf16.msra.mxu0 %v358
    %645 = vmatprep.subr.bf16.mxu0 %v357
    %646 = vmatpush1.bf16.msra.mxu0 %v356
    %647 = vmatprep.subr.bf16.mxu0 %v355
    %648 = vmatpush1.bf16.msra.mxu0 %v354
    %649 = vmatprep.subr.bf16.mxu0 %v353
    %650 = vmatpush1.bf16.msra.mxu0 %v352
    %651 = vmatprep.subr.bf16.mxu0 %v351
    %652 = vmatpush1.bf16.msra.mxu0 %v350
    %653 = vmatprep.subr.bf16.mxu0 %v349
    %654 = vmatpush1.bf16.msra.mxu0 %v348
    %655 = vmatprep.subr.bf16.mxu0 %v347
    %656 = vmatpush1.bf16.msra.mxu0 %v346
    %657 = vmatprep.subr.bf16.mxu0 %v345
    %658 = vmatpush1.bf16.msra.mxu0 %v344
    %659 = vmatprep.subr.bf16.mxu0 %v375
    %660 = vmatpush2.bf16.msra.mxu0 %v374
    %661 = vmatprep.subr.bf16.mxu0 %v373
    %662 = vmatpush2.bf16.msra.mxu0 %v372
    %663 = vmatprep.subr.bf16.mxu0 %v371
    %664 = vmatpush2.bf16.msra.mxu0 %v370
    %665 = vmatprep.subr.bf16.mxu0 %v369
    %666 = vmatpush2.bf16.msra.mxu0 %v368
    %667 = vmatprep.subr.bf16.mxu0 %v367
    %668 = vmatpush2.bf16.msra.mxu0 %v366
    %669 = vmatprep.subr.bf16.mxu0 %v365
    %670 = vmatpush2.bf16.msra.mxu0 %v364
    %671 = vmatprep.subr.bf16.mxu0 %v363
    %672 = vmatpush2.bf16.msra.mxu0 %v362
    %673 = vmatprep.subr.bf16.mxu0 %v361
    %674 = vmatpush2.bf16.msra.mxu0 %v360
    %675 = vmatprep.mubr.bf16.mxu0 %v642
    %676 = vmatmul.mubr.bf16.gmra.mxu0 %v641
    %v677 = vpop.f32.mrf.mxu0
    %v678 = vadd.f32 0.0, %v677
    %v679 = vpop.f32.mrf.mxu0
    %v680 = vadd.f32 0.0, %v679
    %v681 = vpop.f32.mrf.mxu0
    %v682 = vpop.f32.mrf.mxu0
    %683 = vdwg.mxu0
    %v684 = vadd.f32 %v198, %v678
    %v685 = vadd.f32 %v214, %v680
    %v686 = vtanh.pop %v684
    %v687 = vtanh.pop %v685
    %v688 = vpack.c.bf16 %v686, %v686
    %v689 = vpack.c.bf16 %v687, %v687
    %690 = vmatprep.subr.bf16.mxu0 %v359
    %691 = vmatpush1.bf16.msra.mxu0 %v358
    %692 = vmatprep.subr.bf16.mxu0 %v357
    %693 = vmatpush1.bf16.msra.mxu0 %v356
    %694 = vmatprep.subr.bf16.mxu0 %v355
    %695 = vmatpush1.bf16.msra.mxu0 %v354
    %696 = vmatprep.subr.bf16.mxu0 %v353
    %697 = vmatpush1.bf16.msra.mxu0 %v352
    %698 = vmatprep.subr.bf16.mxu0 %v351
    %699 = vmatpush1.bf16.msra.mxu0 %v350
    %700 = vmatprep.subr.bf16.mxu0 %v349
    %701 = vmatpush1.bf16.msra.mxu0 %v348
    %702 = vmatprep.subr.bf16.mxu0 %v347
    %703 = vmatpush1.bf16.msra.mxu0 %v346
    %704 = vmatprep.subr.bf16.mxu0 %v345
    %705 = vmatpush1.bf16.msra.mxu0 %v344
    %706 = vmatprep.subr.bf16.mxu0 %v375
    %707 = vmatpush2.bf16.msra.mxu0 %v374
    %708 = vmatprep.subr.bf16.mxu0 %v373
    %709 = vmatpush2.bf16.msra.mxu0 %v372
    %710 = vmatprep.subr.bf16.mxu0 %v371
    %711 = vmatpush2.bf16.msra.mxu0 %v370
    %712 = vmatprep.subr.bf16.mxu0 %v369
    %713 = vmatpush2.bf16.msra.mxu0 %v368
    %714 = vmatprep.subr.bf16.mxu0 %v367
    %715 = vmatpush2.bf16.msra.mxu0 %v366
    %716 = vmatprep.subr.bf16.mxu0 %v365
    %717 = vmatpush2.bf16.msra.mxu0 %v364
    %718 = vmatprep.subr.bf16.mxu0 %v363
    %719 = vmatpush2.bf16.msra.mxu0 %v362
    %720 = vmatprep.subr.bf16.mxu0 %v361
    %721 = vmatpush2.bf16.msra.mxu0 %v360
    %722 = vmatprep.mubr.bf16.mxu0 %v689
    %723 = vmatmul.mubr.bf16.gmra.mxu0 %v688
    %v724 = vpop.f32.mrf.mxu0
    %v725 = vadd.f32 0.0, %v724
    %v726 = vpop.f32.mrf.mxu0
    %v727 = vadd.f32 0.0, %v726
    %v728 = vpop.f32.mrf.mxu0
    %v729 = vpop.f32.mrf.mxu0
    %730 = vdwg.mxu0
    %v731 = vadd.f32 %v203, %v725
    %v732 = vadd.f32 %v214, %v727
    %v733 = vtanh.pop %v731
    %v734 = vtanh.pop %v732
    %v735 = vpack.c.bf16 %v733, %v733
    %v736 = vpack.c.bf16 %v734, %v734
    %737 = vmatprep.subr.bf16.mxu0 %v359
    %738 = vmatpush1.bf16.msra.mxu0 %v358
    %739 = vmatprep.subr.bf16.mxu0 %v357
    %740 = vmatpush1.bf16.msra.mxu0 %v356
    %741 = vmatprep.subr.bf16.mxu0 %v355
    %742 = vmatpush1.bf16.msra.mxu0 %v354
    %743 = vmatprep.subr.bf16.mxu0 %v353
    %744 = vmatpush1.bf16.msra.mxu0 %v352
    %745 = vmatprep.subr.bf16.mxu0 %v351
    %746 = vmatpush1.bf16.msra.mxu0 %v350
    %747 = vmatprep.subr.bf16.mxu0 %v349
    %748 = vmatpush1.bf16.msra.mxu0 %v348
    %749 = vmatprep.subr.bf16.mxu0 %v347
    %750 = vmatpush1.bf16.msra.mxu0 %v346
    %751 = vmatprep.subr.bf16.mxu0 %v345
    %752 = vmatpush1.bf16.msra.mxu0 %v344
    %753 = vmatprep.subr.bf16.mxu0 %v375
    %754 = vmatpush2.bf16.msra.mxu0 %v374
    %755 = vmatprep.subr.bf16.mxu0 %v373
    %756 = vmatpush2.bf16.msra.mxu0 %v372
    %757 = vmatprep.subr.bf16.mxu0 %v371
    %758 = vmatpush2.bf16.msra.mxu0 %v370
    %759 = vmatprep.subr.bf16.mxu0 %v369
    %760 = vmatpush2.bf16.msra.mxu0 %v368
    %761 = vmatprep.subr.bf16.mxu0 %v367
    %762 = vmatpush2.bf16.msra.mxu0 %v366
    %763 = vmatprep.subr.bf16.mxu0 %v365
    %764 = vmatpush2.bf16.msra.mxu0 %v364
    %765 = vmatprep.subr.bf16.mxu0 %v363
    %766 = vmatpush2.bf16.msra.mxu0 %v362
    %767 = vmatprep.subr.bf16.mxu0 %v361
    %768 = vmatpush2.bf16.msra.mxu0 %v360
    %769 = vmatprep.mubr.bf16.mxu0 %v736
    %770 = vmatmul.mubr.bf16.gmra.mxu0 %v735
    %v771 = vpop.f32.mrf.mxu0
    %v772 = vadd.f32 0.0, %v771
    %v773 = vpop.f32.mrf.mxu0
    %v774 = vadd.f32 0.0, %v773
    %v775 = vpop.f32.mrf.mxu0
    %v776 = vpop.f32.mrf.mxu0
    %777 = vdwg.mxu0
    %v778 = vadd.f32 %v206, %v772
    %v779 = vadd.f32 %v214, %v774
    %v780 = vtanh.pop %v778
    %v781 = vtanh.pop %v779
    %v782 = vpack.c.bf16 %v780, %v780
    %v783 = vpack.c.bf16 %v781, %v781
    %784 = vmatprep.subr.bf16.mxu0 %v359
    %785 = vmatpush1.bf16.msra.mxu0 %v358
    %786 = vmatprep.subr.bf16.mxu0 %v357
    %787 = vmatpush1.bf16.msra.mxu0 %v356
    %788 = vmatprep.subr.bf16.mxu0 %v355
    %789 = vmatpush1.bf16.msra.mxu0 %v354
    %790 = vmatprep.subr.bf16.mxu0 %v353
    %791 = vmatpush1.bf16.msra.mxu0 %v352
    %792 = vmatprep.subr.bf16.mxu0 %v351
    %793 = vmatpush1.bf16.msra.mxu0 %v350
    %794 = vmatprep.subr.bf16.mxu0 %v349
    %795 = vmatpush1.bf16.msra.mxu0 %v348
    %796 = vmatprep.subr.bf16.mxu0 %v347
    %797 = vmatpush1.bf16.msra.mxu0 %v346
    %798 = vmatprep.subr.bf16.mxu0 %v345
    %799 = vmatpush1.bf16.msra.mxu0 %v344
    %800 = vmatprep.subr.bf16.mxu0 %v375
    %801 = vmatpush2.bf16.msra.mxu0 %v374
    %802 = vmatprep.subr.bf16.mxu0 %v373
    %803 = vmatpush2.bf16.msra.mxu0 %v372
    %804 = vmatprep.subr.bf16.mxu0 %v371
    %805 = vmatpush2.bf16.msra.mxu0 %v370
    %806 = vmatprep.subr.bf16.mxu0 %v369
    %807 = vmatpush2.bf16.msra.mxu0 %v368
    %808 = vmatprep.subr.bf16.mxu0 %v367
    %809 = vmatpush2.bf16.msra.mxu0 %v366
    %810 = vmatprep.subr.bf16.mxu0 %v365
    %811 = vmatpush2.bf16.msra.mxu0 %v364
    %812 = vmatprep.subr.bf16.mxu0 %v363
    %813 = vmatpush2.bf16.msra.mxu0 %v362
    %814 = vmatprep.subr.bf16.mxu0 %v361
    %815 = vmatpush2.bf16.msra.mxu0 %v360
    %816 = vmatprep.mubr.bf16.mxu0 %v783
    %817 = vmatmul.mubr.bf16.gmra.mxu0 %v782
    %v818 = vpop.f32.mrf.mxu0
    %v819 = vpop.f32.mrf.mxu0
    %v820 = vadd.f32 0.0, %v819
    %v821 = vpop.f32.mrf.mxu0
    %v822 = vpop.f32.mrf.mxu0
    %823 = vdwg.mxu0
    %v824 = vadd.f32 %v214, %v820
    %v825 = vtanh.pop %v824
    %v826 = vpack.c.bf16 %v825, %v825
    %v827 = vld [vmem:[%s5] sm:$0xf]
    %v828 = vld [vmem:[%s5 + $0x4] sm:$0xf]
    %v829 = vld [vmem:[%s5 + $0x8] sm:$0xf]
    %v830 = vld [vmem:[%s5 + $0xc] sm:$0xf]
    %v831 = vld [vmem:[%s5 + $0x10] sm:$0xf]
    %v832 = vld [vmem:[%s5 + $0x14] sm:$0xf]
    %v833 = vld [vmem:[%s5 + $0x18] sm:$0xf]
    %v834 = vld [vmem:[%s5 + $0x1c] sm:$0xf]
    %v835 = vld [vmem:[%s5 + $0x20] sm:$0xf]
    %v836 = vld [vmem:[%s5 + $0x24] sm:$0xf]
    %v837 = vld [vmem:[%s5 + $0x28] sm:$0xf]
    %v838 = vld [vmem:[%s5 + $0x2c] sm:$0xf]
    %v839 = vld [vmem:[%s5 + $0x30] sm:$0xf]
    %v840 = vld [vmem:[%s5 + $0x34] sm:$0xf]
    %v841 = vld [vmem:[%s5 + $0x38] sm:$0xf]
    %v842 = vld [vmem:[%s5 + $0x3c] sm:$0xf]
    %v843 = vld [vmem:[%s6] sm:$0x1]
    %v845 = vlaneseq
    %v846 = vshrl.u32 %v845, 7
    %v847 = vsub.s32 0, %v846
    %v848 = vrot.slane %v843, %v847
    %v866 = vunpack.c.l.b16 %v827
    %v867 = vunpack.c.l.b16 %v828
    %v868 = vunpack.c.l.b16 %v829
    %v869 = vunpack.c.l.b16 %v830
    %v870 = vunpack.c.l.b16 %v831
    %v871 = vunpack.c.l.b16 %v832
    %v872 = vunpack.c.l.b16 %v833
    %v873 = vunpack.c.l.b16 %v834
    %v874 = vunpack.c.l.b16 %v835
    %v875 = vunpack.c.l.b16 %v836
    %v876 = vunpack.c.l.b16 %v837
    %v877 = vunpack.c.l.b16 %v838
    %v878 = vunpack.c.l.b16 %v839
    %v879 = vunpack.c.l.b16 %v840
    %v880 = vunpack.c.l.b16 %v841
    %v881 = vunpack.c.l.b16 %v842
    %v882 = vpack.c.b16 %v867, %v866
    %v883 = vpack.c.b16 %v869, %v868
    %v884 = vpack.c.b16 %v871, %v870
    %v885 = vpack.c.b16 %v873, %v872
    %v886 = vpack.c.b16 %v875, %v874
    %v887 = vpack.c.b16 %v877, %v876
    %v888 = vpack.c.b16 %v879, %v878
    %v889 = vpack.c.b16 %v881, %v880
    %898 = vmatprep.subr.bf16.mxu0 0
    %899 = vmatpush1.bf16.msra.mxu0 %v889
    %900 = vmatprep.subr.bf16.mxu0 0
    %901 = vmatpush1.bf16.msra.mxu0 %v888
    %902 = vmatprep.subr.bf16.mxu0 0
    %903 = vmatpush1.bf16.msra.mxu0 %v887
    %904 = vmatprep.subr.bf16.mxu0 0
    %905 = vmatpush1.bf16.msra.mxu0 %v886
    %906 = vmatprep.subr.bf16.mxu0 0
    %907 = vmatpush1.bf16.msra.mxu0 %v885
    %908 = vmatprep.subr.bf16.mxu0 0
    %909 = vmatpush1.bf16.msra.mxu0 %v884
    %910 = vmatprep.subr.bf16.mxu0 0
    %911 = vmatpush1.bf16.msra.mxu0 %v883
    %912 = vmatprep.subr.bf16.mxu0 0
    %913 = vmatpush1.bf16.msra.mxu0 %v882
    %914 = vmatprep.subr.bf16.mxu0 0
    %915 = vmatpush2.bf16.msra.mxu0 0
    %916 = vmatprep.subr.bf16.mxu0 0
    %917 = vmatpush2.bf16.msra.mxu0 0
    %918 = vmatprep.subr.bf16.mxu0 0
    %919 = vmatpush2.bf16.msra.mxu0 0
    %920 = vmatprep.subr.bf16.mxu0 0
    %921 = vmatpush2.bf16.msra.mxu0 0
    %922 = vmatprep.subr.bf16.mxu0 0
    %923 = vmatpush2.bf16.msra.mxu0 0
    %924 = vmatprep.subr.bf16.mxu0 0
    %925 = vmatpush2.bf16.msra.mxu0 0
    %926 = vmatprep.subr.bf16.mxu0 0
    %927 = vmatpush2.bf16.msra.mxu0 0
    %928 = vmatprep.subr.bf16.mxu0 0
    %929 = vmatpush2.bf16.msra.mxu0 0
    %930 = vmatprep.mubr.bf16.mxu0 0
    %931 = vmatmul.mubr.bf16.gmra.mxu0 %v826
    %v932 = vpop.f32.mrf.mxu0
    %v933 = vadd.f32 %v848, %v932
    %v934 = vpop.f32.mrf.mxu0
    %v935 = vpop.f32.mrf.mxu0
    %v936 = vpop.f32.mrf.mxu0
    %937 = vdwg.mxu0
    %938 = vst [vmem:[%s7] sm:$0xff] %v933
    // Predicated region
    $region34: #{rnn_model_forward.1} parent=1 // pred_check
      _
    $region35: #{rnn_model_forward.1} parent=1 // pred_check_branch
      %940 = sbr.rel (0) target = $region37
    $region36: #{rnn_model_forward.1} parent=1 // pred_region
      _
    $region37: #{rnn_model_forward.1} parent=1 // pred_fallthru
      _
    // Predicated region
    $region38: #{rnn_model_forward.1} parent=1 // pred_check
      _
    $region39: #{rnn_model_forward.1} parent=1 // pred_check_branch
      %942 = sbr.rel (0) target = $region41
    $region40: #{rnn_model_forward.1} parent=1 // pred_region
      _
    $region41: #{rnn_model_forward.1} parent=1 // pred_fallthru
      _
    %943 = vsyncpa [#allocation3], 1

</llo_original>
